<compile_context>
chip_gen: v7x
topology: tpu7x:2x2x1
jax: 0.10.0
libtpu: 0.0.40
codegen_flags: <defaults>
</compile_context>

<pallas_src>
import jax
import jax.numpy as jnp
from jax import lax
from jax.experimental import pallas as pl
from jax.experimental.pallas import tpu as pltpu


def self_attention_kernel(x_ref, wqkv_ref, bqkv_ref, gamma_ref, o_ref):
    # x_ref / o_ref: (Bblk, C, N) tiles; wqkv_ref: (2*C8+C, C); bqkv_ref: (2*C8+C, 1)
    bblk, C, _ = x_ref.shape
    C8 = (wqkv_ref.shape[0] - C) // 2
    gamma = gamma_ref[0]

    wqkv = wqkv_ref[...]                       # hoisted: loaded once per grid step
    bqkv = bqkv_ref[...]

    for b in range(bblk):                      # static unroll over the batch block
        x = x_ref[b]                           # (C, N), lane dim = N

        # Fused Q|K|V 1x1-conv projection: one (2*C8+C, C) x (C, N) MXU matmul.
        qkv = lax.dot_general(wqkv, x, (((1,), (0,)), ((), ())),
                              preferred_element_type=jnp.float32) + bqkv
        q = qkv[:C8]                           # (C8, N)
        k = qkv[C8:2 * C8]                     # (C8, N)
        v = qkv[2 * C8:]                       # (C,  N)

        # energy[i, j] = <q[:, i], k[:, j]>  (contract channel dim; no k.T temp)
        energy = lax.dot_general(q, k, (((0,), (0,)), ((), ())),
                                 preferred_element_type=jnp.float32)   # (N, N)

        # numerically-stable softmax over j; reciprocal goes to the EUP slot
        m = jnp.max(energy, axis=-1, keepdims=True)
        p = jnp.exp(energy - m)
        attn = p * pl.reciprocal(jnp.sum(p, axis=-1, keepdims=True), approx=True)

        # out[:, i] = sum_j v[:, j] * attn[i, j]  == torch bmm(value, attention^T)
        out = lax.dot_general(v, attn, (((1,), (1,)), ((), ())),
                              preferred_element_type=jnp.float32)      # (C, N)

        o_ref[b] = gamma * out + x
        # TODO(synk): flash-tile the (N, N) softmax (online m/l/acc over KV
        # blocks) once N exceeds ~1-2K so it fits v7x's 64 MiB VMEM.


def _pick_batch_block(B: int) -> int:
    """Largest divisor of B (<= 8) that still leaves >= 2 grid steps (v7x has 2 TCs)."""
    if B <= 2:
        return 1
    best = 1
    for cand in range(1, min(B, 8) + 1):
        if B % cand == 0 and B // cand >= 2:
            best = cand
    return best


def self_attention(x_nchw, params, batch_block=None):
    """x_nchw: (B, C, W, H) float32. params: dict of weights. Returns (B, C, W, H)."""
    B, C, W, H = x_nchw.shape
    N = W * H
    C8 = C // 8
    Co = 2 * C8 + C

    bblk = _pick_batch_block(B) if batch_block is None else batch_block
    assert B % bblk == 0

    # (B, C, W, H) -> (B, C, N): pure row-major reshape, no extra HBM transpose pass.
    x_flat = x_nchw.reshape(B, C, N).astype(jnp.float32)

    # Fuse the three 1x1-conv weights / biases into one wide projection.
    wqkv = jnp.concatenate([params["wq"], params["wk"], params["wv"]], axis=0)   # (Co, C)
    bqkv = jnp.concatenate([params["bq"], params["bk"], params["bv"]])[:, None]  # (Co, 1)
    gamma = params["gamma"]                                                      # (1,)

    out_flat = pl.pallas_call(
        self_attention_kernel,
        out_shape=jax.ShapeDtypeStruct((B, C, N), jnp.float32),
        grid_spec=pltpu.PrefetchScalarGridSpec(
            num_scalar_prefetch=0,
            grid=(B // bblk,),
            in_specs=[
                pl.BlockSpec((bblk, C, N), lambda i: (i, 0, 0)),   # x tile
                pl.BlockSpec((Co, C), lambda i: (0, 0)),           # fused Wqkv
                pl.BlockSpec((Co, 1), lambda i: (0, 0)),           # fused bias
                pl.BlockSpec(memory_space=pltpu.SMEM),             # gamma scalar
            ],
            out_specs=pl.BlockSpec((bblk, C, N), lambda i: (i, 0, 0)),
        ),
        compiler_params=pltpu.CompilerParams(
            dimension_semantics=("parallel",),
            # Default scoped VMEM is only 16 MiB (v5e) / 32 MiB (v6e, v7x);
            # raise it while staying within v7x's 64 MiB physical VMEM.
            vmem_limit_bytes=64 * 1024 * 1024,
        ),
    )(x_flat, wqkv, bqkv, gamma)

    return out_flat.reshape(B, C, W, H)


def init_params(key, C):
    """Deterministic params matching Conv2d(in, out, kernel_size=1) shapes ((C_out, C_in))."""
    C8 = C // 8
    k1, k2, k3, k4, k5, k6 = jax.random.split(key, 6)
    scale = 1.0 / jnp.sqrt(C)
    return {
        "wq": jax.random.uniform(k1, (C8, C), jnp.float32, -scale, scale),
        "bq": jax.random.uniform(k2, (C8,), jnp.float32, -scale, scale),
        "wk": jax.random.uniform(k3, (C8, C), jnp.float32, -scale, scale),
        "bk": jax.random.uniform(k4, (C8,), jnp.float32, -scale, scale),
        "wv": jax.random.uniform(k5, (C, C), jnp.float32, -scale, scale),
        "bv": jax.random.uniform(k6, (C,), jnp.float32, -scale, scale),
        # nn.Parameter(torch.zeros(1)) in torch; nonzero here so the attention
        # path actually contributes to the checked output.
        "gamma": jnp.array([0.5], dtype=jnp.float32),
    }


def reference(x_nchw, params):
    """Pure-JAX reference reproducing the PyTorch forward exactly."""
    B, C, W, H = x_nchw.shape
    N = W * H
    xf = x_nchw.reshape(B, C, N)                                               # (B, C, N)
    q = jnp.einsum("oc,bcn->bon", params["wq"], xf) + params["bq"][None, :, None]
    k = jnp.einsum("oc,bcn->bon", params["wk"], xf) + params["bk"][None, :, None]
    v = jnp.einsum("oc,bcn->bon", params["wv"], xf) + params["bv"][None, :, None]
    energy = jnp.einsum("bon,bom->bnm", q, k)          # bmm(proj_query, proj_key)
    attn = jax.nn.softmax(energy, axis=-1)
    out = jnp.einsum("bcn,bmn->bcm", v, attn)          # bmm(value, attention^T)
    return (params["gamma"][0] * out + xf).reshape(B, C, W, H)


if __name__ == "__main__":
    B, C, W, H = 2, 32, 16, 16     # in_dim=32 -> in_dim//8 = 4; N = W*H = 256
    key = jax.random.PRNGKey(0)
    kx, kp = jax.random.split(key)
    x = jax.random.normal(kx, (B, C, W, H), dtype=jnp.float32)
    params = init_params(kp, C)

    out = jax.block_until_ready(self_attention(x, params))
    ref = reference(x, params)

    assert out.shape == (B, C, W, H)
    # 1e-3 tolerance accommodates the approximate (EUP) reciprocal in the
    # softmax and MXU accumulation-order differences; everything else is f32.
    assert jnp.allclose(out, ref, atol=1e-3, rtol=1e-3), "mismatch vs reference"
    print("KERNEL_OK")
</pallas_src>

<mosaic_0001>
module attributes {stable_mosaic.version = 11 : i64} {
  func.func @self_attention_kernel(%arg0: i32, %arg1: memref<1x32x256xf32, #tpu.memory_space<vmem>>, %arg2: memref<40x32xf32, #tpu.memory_space<vmem>>, %arg3: memref<40x1xf32, #tpu.memory_space<vmem>>, %arg4: memref<1xf32, #tpu.memory_space<smem>>, %arg5: memref<1x32x256xf32, #tpu.memory_space<vmem>>) attributes {dimension_semantics = [#tpu.dimension_semantics<parallel>], iteration_bounds = array<i64: 2>, scalar_prefetch = 0 : i64, scratch_operands = 0 : i64, tpu.core_type = #tpu.core_type<tc>, window_params = [{transform_indices = @transform_0, window_bounds = array<i64: 1, 32, 256>}, {pipeline_mode = #tpu.pipeline_mode<synchronous>, transform_indices = @transform_1, window_bounds = array<i64: 40, 32>}, {pipeline_mode = #tpu.pipeline_mode<synchronous>, transform_indices = @transform_2, window_bounds = array<i64: 40, 1>}, {transform_indices = @transform_3, window_bounds = array<i64: 1>}, {transform_indices = @transform_4, window_bounds = array<i64: 1, 32, 256>}]} {
    %c0 = arith.constant 0 : index
    %0 = memref.load %arg4[%c0] : memref<1xf32, #tpu.memory_space<smem>>
    %c0_0 = arith.constant 0 : index
    %c0_1 = arith.constant 0 : index
    %1 = vector.load %arg2[%c0_0, %c0_1] : memref<40x32xf32, #tpu.memory_space<vmem>>, vector<40x32xf32>
    %c0_2 = arith.constant 0 : index
    %c0_3 = arith.constant 0 : index
    %2 = vector.load %arg3[%c0_2, %c0_3] : memref<40x1xf32, #tpu.memory_space<vmem>>, vector<40x1xf32>
    %c0_4 = arith.constant 0 : index
    %c0_5 = arith.constant 0 : index
    %c0_6 = arith.constant 0 : index
    %3 = vector.load %arg1[%c0_4, %c0_5, %c0_6] : memref<1x32x256xf32, #tpu.memory_space<vmem>>, vector<1x32x256xf32>
    %4 = vector.shape_cast %3 : vector<1x32x256xf32> to vector<32x256xf32>
    %cst = arith.constant dense<0.000000e+00> : vector<40x256xf32>
    %5 = tpu.matmul %1, %4, %cst {dimension_numbers = #tpu.dot_dimension_numbers<[1], [0], [0], [1], [0, 0, 1, 1], [], []>} : vector<40x32xf32>, vector<32x256xf32>, vector<40x256xf32> -> vector<40x256xf32>
    %6 = vector.broadcast %2 : vector<40x1xf32> to vector<40x256xf32>
    %7 = arith.addf %5, %6 : vector<40x256xf32>
    %8 = vector.extract_strided_slice %7 {offsets = [0, 0], sizes = [4, 256], strides = [1, 1]} : vector<40x256xf32> to vector<4x256xf32>
    %9 = vector.extract_strided_slice %7 {offsets = [4, 0], sizes = [4, 256], strides = [1, 1]} : vector<40x256xf32> to vector<4x256xf32>
    %10 = vector.extract_strided_slice %7 {offsets = [8, 0], sizes = [32, 256], strides = [1, 1]} : vector<40x256xf32> to vector<32x256xf32>
    %cst_7 = arith.constant dense<0.000000e+00> : vector<256x256xf32>
    %11 = tpu.matmul %8, %9, %cst_7 {dimension_numbers = #tpu.dot_dimension_numbers<[0], [0], [1], [1], [0, 1, 1, 1], [], []>} : vector<4x256xf32>, vector<4x256xf32>, vector<256x256xf32> -> vector<256x256xf32>
    %cst_8 = arith.constant dense<0xFF800000> : vector<256xf32>
    %12 = vector.multi_reduction <maximumf>, %11, %cst_8 [1] : vector<256x256xf32> to vector<256xf32>
    %13 = vector.shape_cast %12 : vector<256xf32> to vector<256x1xf32>
    %14 = vector.broadcast %13 : vector<256x1xf32> to vector<256x256xf32>
    %15 = arith.subf %11, %14 : vector<256x256xf32>
    %16 = math.exp %15 : vector<256x256xf32>
    %cst_9 = arith.constant dense<0.000000e+00> : vector<256xf32>
    %17 = vector.multi_reduction <add>, %16, %cst_9 [1] : vector<256x256xf32> to vector<256xf32>
    %18 = vector.shape_cast %17 : vector<256xf32> to vector<256x1xf32>
    %19 = tpu.reciprocal %18 {approx = true} : vector<256x1xf32> -> vector<256x1xf32>
    %20 = vector.broadcast %19 : vector<256x1xf32> to vector<256x256xf32>
    %21 = arith.mulf %16, %20 : vector<256x256xf32>
    %cst_10 = arith.constant dense<0.000000e+00> : vector<32x256xf32>
    %22 = tpu.matmul %10, %21, %cst_10 {dimension_numbers = #tpu.dot_dimension_numbers<[1], [1], [0], [0], [0, 0, 1, 0], [], []>} : vector<32x256xf32>, vector<256x256xf32>, vector<32x256xf32> -> vector<32x256xf32>
    %23 = vector.broadcast %0 : f32 to vector<32x256xf32>
    %24 = arith.mulf %23, %22 : vector<32x256xf32>
    %25 = arith.addf %24, %4 : vector<32x256xf32>
    %c0_11 = arith.constant 0 : index
    %c0_12 = arith.constant 0 : index
    %c0_13 = arith.constant 0 : index
    %26 = vector.load %arg5[%c0_11, %c0_12, %c0_13] : memref<1x32x256xf32, #tpu.memory_space<vmem>>, vector<1x32x256xf32>
    %27 = vector.shape_cast %26 : vector<1x32x256xf32> to vector<32x256xf32>
    %28 = vector.shape_cast %25 : vector<32x256xf32> to vector<1x32x256xf32>
    tpu.vector_store %arg5[%c0_11, %c0_12, %c0_13], %28 {strides = array<i32>} : memref<1x32x256xf32, #tpu.memory_space<vmem>>, vector<1x32x256xf32>,
    return
  }
  func.func @transform_0(%arg0: i32) -> (i32, i32, i32) {
    %c0_i32 = arith.constant 0 : i32
    %c0_i32_0 = arith.constant 0 : i32
    %c0_i32_1 = arith.constant 0 : i32
    return %arg0, %c0_i32, %c0_i32_0 : i32, i32, i32
  }
  func.func @transform_1(%arg0: i32) -> (i32, i32) {
    %c0_i32 = arith.constant 0 : i32
    %c0_i32_0 = arith.constant 0 : i32
    %c0_i32_1 = arith.constant 0 : i32
    return %c0_i32, %c0_i32_0 : i32, i32
  }
  func.func @transform_2(%arg0: i32) -> (i32, i32) {
    %c0_i32 = arith.constant 0 : i32
    %c0_i32_0 = arith.constant 0 : i32
    %c0_i32_1 = arith.constant 0 : i32
    return %c0_i32, %c0_i32_0 : i32, i32
  }
  func.func @transform_3(%arg0: i32) -> i32 {
    %c0_i32 = arith.constant 0 : i32
    %c0_i32_0 = arith.constant 0 : i32
    return %c0_i32 : i32
  }
  func.func @transform_4(%arg0: i32) -> (i32, i32, i32) {
    %c0_i32 = arith.constant 0 : i32
    %c0_i32_0 = arith.constant 0 : i32
    %c0_i32_1 = arith.constant 0 : i32
    return %arg0, %c0_i32, %c0_i32_0 : i32, i32, i32
  }
}

</mosaic_0001>

<llo_original>
// kernel: tpu_custom_call.1
$region0: #{tpu_custom_call.1}
  #allocation0 [shape = 'u32[]', space=smem, size = 0x4, offset = 0x4, fixed_abs, tag = 'smem constant byte address 0x4 - core index']
  #allocation1 [shape = 'u32[144,128]{1,0:T(1,128)}', space=vmem, size = 0x12000, scoped, tag = 'internal scratch']
  #allocation2 [shape = 'f32[1]{0:T(128)S(6)}', space=smem, size = 0x200, scoped, tag = 'scoped memory for tpu_custom_call.1']
  %s0 = inlined_call_operand.hbm [shape: f32[2,32,256], index: 0, kind: input, shape index: {}]
  %s1 = inlined_call_operand.hbm [shape: f32[40,32], index: 1, kind: input, shape index: {}]
  %s2 = inlined_call_operand.hbm [shape: f32[40,1], index: 2, kind: input, shape index: {}]
  %s3 = inlined_call_operand.<no memory space> [shape: f32[1], index: 3, kind: input, shape index: {}]
  %s4 = inlined_call_operand.hbm [shape: f32[2,32,256], index: 4, kind: output, shape index: {}]
  %s5 = sld [smem:[#allocation0]]
  $region61: #{tpu_custom_call.1} parent=0
    _
  %s7 = ssub.s32 1, %s5
  %s8 = scalar_select 0, %s7, %s5
  %9 = sst [smem:[#allocation2]] %s3
  $region1: #{tpu_custom_call.1} parent=0
    #allocation3 [shape = 'u8[65536]{0}', space=vmem, size = 0x10000, scoped, tag = 'input window, operand 0']
    #allocation4 [shape = 's32[2]{0}', space=sflag, size = 0x8, scoped, tag = 'scoped memory for tpu_custom_call.1']
    #allocation5 [shape = 's32[2]{0}', space=sflag, size = 0x8, scoped, tag = 'scoped memory for tpu_custom_call.1']
    #allocation6 [shape = 'u8[20480]{0}', space=vmem, size = 0x5000, scoped, tag = 'input window, operand 1, single buffered']
    #allocation7 [shape = 's32[1]{0}', space=sflag, size = 0x4, scoped, tag = 'scoped memory for tpu_custom_call.1']
    #allocation8 [shape = 'u8[20480]{0}', space=vmem, size = 0x5000, scoped, tag = 'input window, operand 2, single buffered']
    #allocation9 [shape = 'u8[65536]{0}', space=vmem, size = 0x10000, scoped, tag = 'output window, operand 0']
    %10 = vsyncpa [#allocation4], 0
    %s11 = scalar_lea.sflag [#allocation4], 1
    %12 = vsyncpa %s11, 0
    %13 = vsyncpa [#allocation7], 0
    %14 = vsyncpa [#allocation5], 0
    %s15 = scalar_lea.sflag [#allocation5], 1
    %16 = vsyncpa %s15, 0
    loop: start=0, step=1, limit=4
    $region2: #{tpu_custom_call.1} parent=1 // loop_pre_header
      _
    $region3: #{tpu_custom_call.1} parent=1 // loop_header
      %s18 = sphi 0, %s22
      %p19 = scmp.ge.s32.totalorder %s18, 4
      %s28 = sphi 0, %s30
      %s31 = sphi 0, %s28
      %s32 = sphi 0, %s31
      %s48 = sphi 0, %s32
      %s52 = sphi 0, %s52
      %s54 = sphi 0, %s52
      %s55 = sphi 0, %s54
      %s69 = sphi 0, %s55
      %s73 = sphi 0, %s73
      %s75 = sphi 0, %s73
      %s76 = sphi 0, %s75
      %s90 = sphi 0, %s76
      %s94 = sphi 0, %s94
      %s96 = sphi 0, %s94
      %s97 = sphi 0, %s96
      %s111 = sphi 0, %s97
      %s117 = sphi 0, %s119
      %s120 = sphi 0, %s117
      %s121 = sphi 0, %s120
      %s137 = sphi 0, %s121
    $region4: #{tpu_custom_call.1} parent=1 // loop_header_branch
      %21 = sbr.rel (%p19) target = $region8
    $region5: #{tpu_custom_call.1} parent=1 // loop_body
      %s23 = ssub.s32 %s18, 1
      %s24 = ssub.s32 %s18, 2
      %s25 = sadd.s32 %s18, 1
      %s26 = ssub.s32 %s18, %s25
      %p27 = scmp.eq.s32.totalorder %s26, 0
      %s29 = sadd.s32 %s28, 1
      %s30 = scalar_select %p27, %s28, %s29
      %p33 = pneg %p27
      %p34 = scmp.eq.s32.totalorder %s18, 1
      %p35 = por %p33, %p34
      %p36 = scmp.ne.s32.totalorder %s28, %s31
      %p37 = scmp.eq.s32.totalorder %s18, 0
      %p38 = por %p36, %p37
      %p39 = scmp.ne.s32.totalorder %s28, %s31
      %p40 = scmp.eq.s32.totalorder %s23, 1
      %p41 = por %p39, %p40
      %p42 = scmp.ne.s32.totalorder %s31, %s32
      %p43 = scmp.eq.s32.totalorder %s23, 0
      %p44 = por %p42, %p43
      %p45 = scmp.ne.s32.totalorder %s31, %s32
      %p46 = scmp.eq.s32.totalorder %s24, 1
      %p47 = por %p45, %p46
      %p49 = scmp.ne.s32.totalorder %s32, %s48
      %p50 = scmp.eq.s32.totalorder %s24, 0
      %p51 = por %p49, %p50
      %s53 = sadd.s32 %s52, 1
      %p56 = scmp.eq.s32.totalorder %s18, 1
      %p57 = scmp.ne.s32.totalorder %s52, %s54
      %p58 = scmp.eq.s32.totalorder %s18, 0
      %p59 = por %p57, %p58
      %p60 = scmp.ne.s32.totalorder %s52, %s54
      %p61 = scmp.eq.s32.totalorder %s23, 1
      %p62 = por %p60, %p61
      %p63 = scmp.ne.s32.totalorder %s54, %s55
      %p64 = scmp.eq.s32.totalorder %s23, 0
      %p65 = por %p63, %p64
      %p66 = scmp.ne.s32.totalorder %s54, %s55
      %p67 = scmp.eq.s32.totalorder %s24, 1
      %p68 = por %p66, %p67
      %p70 = scmp.ne.s32.totalorder %s55, %s69
      %p71 = scmp.eq.s32.totalorder %s24, 0
      %p72 = por %p70, %p71
      %s74 = sadd.s32 %s73, 1
      %p77 = scmp.eq.s32.totalorder %s18, 1
      %p78 = scmp.ne.s32.totalorder %s73, %s75
      %p79 = scmp.eq.s32.totalorder %s18, 0
      %p80 = por %p78, %p79
      %p81 = scmp.ne.s32.totalorder %s73, %s75
      %p82 = scmp.eq.s32.totalorder %s23, 1
      %p83 = por %p81, %p82
      %p84 = scmp.ne.s32.totalorder %s75, %s76
      %p85 = scmp.eq.s32.totalorder %s23, 0
      %p86 = por %p84, %p85
      %p87 = scmp.ne.s32.totalorder %s75, %s76
      %p88 = scmp.eq.s32.totalorder %s24, 1
      %p89 = por %p87, %p88
      %p91 = scmp.ne.s32.totalorder %s76, %s90
      %p92 = scmp.eq.s32.totalorder %s24, 0
      %p93 = por %p91, %p92
      %s95 = sadd.s32 %s94, 1
      %p98 = scmp.eq.s32.totalorder %s18, 1
      %p99 = scmp.ne.s32.totalorder %s94, %s96
      %p100 = scmp.eq.s32.totalorder %s18, 0
      %p101 = por %p99, %p100
      %p102 = scmp.ne.s32.totalorder %s94, %s96
      %p103 = scmp.eq.s32.totalorder %s23, 1
      %p104 = por %p102, %p103
      %p105 = scmp.ne.s32.totalorder %s96, %s97
      %p106 = scmp.eq.s32.totalorder %s23, 0
      %p107 = por %p105, %p106
      %p108 = scmp.ne.s32.totalorder %s96, %s97
      %p109 = scmp.eq.s32.totalorder %s24, 1
      %p110 = por %p108, %p109
      %p112 = scmp.ne.s32.totalorder %s97, %s111
      %p113 = scmp.eq.s32.totalorder %s24, 0
      %p114 = por %p112, %p113
      %s115 = ssub.s32 %s18, %s25
      %p116 = scmp.eq.s32.totalorder %s115, 0
      %s118 = sadd.s32 %s117, 1
      %s119 = scalar_select %p116, %s117, %s118
      %p122 = pneg %p116
      %p123 = scmp.eq.s32.totalorder %s18, 1
      %p124 = por %p122, %p123
      %p125 = scmp.ne.s32.totalorder %s117, %s120
      %p126 = scmp.eq.s32.totalorder %s18, 0
      %p127 = por %p125, %p126
      %p128 = scmp.ne.s32.totalorder %s117, %s120
      %p129 = scmp.eq.s32.totalorder %s23, 1
      %p130 = por %p128, %p129
      %p131 = scmp.ne.s32.totalorder %s120, %s121
      %p132 = scmp.eq.s32.totalorder %s23, 0
      %p133 = por %p131, %p132
      %p134 = scmp.ne.s32.totalorder %s120, %s121
      %p135 = scmp.eq.s32.totalorder %s24, 1
      %p136 = por %p134, %p135
      %p138 = scmp.ne.s32.totalorder %s121, %s137
      %p139 = scmp.eq.s32.totalorder %s24, 0
      %p140 = por %p138, %p139
      %p141 = scmp.le.s32.totalorder 1, %s18
      %p142 = scmp.lt.s32.totalorder %s18, 3
      %p143 = pnand %p141, %p142
      %p144 = pneg %p143
      // Predicated region
      $region9: #{tpu_custom_call.1} parent=5 // pred_check
        _
      $region10: #{tpu_custom_call.1} parent=5 // pred_check_branch
        %146 = sbr.rel (%p143) target = $region12
      $region11: #{tpu_custom_call.1} parent=5 // pred_region
        %s147 = ssub.s32 %s18, 1
        // Predicated region
        $region13: #{tpu_custom_call.1} parent=11 // pred_check
          %p148 = pneg %p65
        $region14: #{tpu_custom_call.1} parent=11 // pred_check_branch
          %150 = sbr.rel (%p148) target = $region16
        $region15: #{tpu_custom_call.1} parent=11 // pred_region
          %s152 = ssub.s32 640, 640
          %153 = vsyncadd [#allocation7], %s152
          %s154 = sshll.u32 [#allocation6], 4
          %s155 = int_to_ptr.vmem [resolvable:$true] %s154
          %160 = dma.hbm_to_vmem [thread:$0]  %s1, 640, %s155, [#allocation7], 128, 128, 8
        $region16: #{tpu_custom_call.1} parent=11 // pred_fallthru
          _
        // Predicated region
        $region17: #{tpu_custom_call.1} parent=11 // pred_check
          %p161 = pneg %p86
        $region18: #{tpu_custom_call.1} parent=11 // pred_check_branch
          %163 = sbr.rel (%p161) target = $region20
        $region19: #{tpu_custom_call.1} parent=11 // pred_region
          %s165 = ssub.s32 640, 640
          %166 = vsyncadd [#allocation7], %s165
          %s167 = sshll.u32 [#allocation8], 4
          %s168 = int_to_ptr.vmem [resolvable:$true] %s167
          %173 = dma.hbm_to_vmem [thread:$0]  %s2, 640, %s168, [#allocation7], 128, 128, 8
        $region20: #{tpu_custom_call.1} parent=11 // pred_fallthru
          _
        // Predicated region
        $region21: #{tpu_custom_call.1} parent=11 // pred_check
          %p174 = pneg %p107
        $region22: #{tpu_custom_call.1} parent=11 // pred_check_branch
          %176 = sbr.rel (%p174) target = $region24
        $region23: #{tpu_custom_call.1} parent=11 // pred_region
          _
        $region24: #{tpu_custom_call.1} parent=11 // pred_fallthru
          _
      $region12: #{tpu_custom_call.1} parent=5 // pred_fallthru
        _
      %p177 = scmp.lt.s32.totalorder %s18, 2
      // Predicated region
      $region25: #{tpu_custom_call.1} parent=5 // pred_check
        %p178 = pneg %p177
      $region26: #{tpu_custom_call.1} parent=5 // pred_check_branch
        %180 = sbr.rel (%p178) target = $region28
      $region27: #{tpu_custom_call.1} parent=5 // pred_region
        // Predicated region
        $region29: #{tpu_custom_call.1} parent=27 // pred_check
          %p181 = pneg %p38
        $region30: #{tpu_custom_call.1} parent=27 // pred_check_branch
          %183 = sbr.rel (%p181) target = $region32
        $region31: #{tpu_custom_call.1} parent=27 // pred_region
          %s184 = sand.u32 %s28, 1
          %s185 = scalar_lea.sflag [#allocation4], %s184
          %s186 = sand.u32 %s28, 1
          %s187 = smul.addr %s186, 64
          %s188 = scalar_lea.vmem [#allocation3], %s187
          %s190 = ssub.s32 1024, 1024
          %191 = vsyncadd %s185, %s190
          %s192 = smul.addr %s18, 8
          %s193 = smul.addr %s192, 128
          %s194 = scalar_lea.hbm %s0, %s193
          %s195 = sshll.u32 %s188, 4
          %s196 = int_to_ptr.vmem [resolvable:$true] %s195
          %201 = dma.hbm_to_vmem [thread:$0]  %s194, 1024, %s196, %s185, 256, 256, 16
        $region32: #{tpu_custom_call.1} parent=27 // pred_fallthru
          _
      $region28: #{tpu_custom_call.1} parent=5 // pred_fallthru
        _
      %p202 = scmp.le.s32.totalorder 1, %s18
      %p203 = scmp.lt.s32.totalorder %s18, 3
      %p204 = pnand %p202, %p203
      %p205 = pneg %p204
      // Predicated region
      $region33: #{tpu_custom_call.1} parent=5 // pred_check
        _
      $region34: #{tpu_custom_call.1} parent=5 // pred_check_branch
        %207 = sbr.rel (%p204) target = $region36
      $region35: #{tpu_custom_call.1} parent=5 // pred_region
        %s208 = ssub.s32 %s18, 1
        %s209 = sand.u32 %s31, 1
        %s210 = scalar_lea.sflag [#allocation4], %s209
        %s211 = sand.u32 %s31, 1
        %s212 = smul.addr %s211, 64
        %s213 = scalar_lea.vmem [#allocation3], %s212
        // Predicated region
        $region37: #{tpu_custom_call.1} parent=35 // pred_check
          %p214 = pneg %p44
        $region38: #{tpu_custom_call.1} parent=35 // pred_check_branch
          %216 = sbr.rel (%p214) target = $region40
        $region39: #{tpu_custom_call.1} parent=35 // pred_region
          %217 = dma.done %s210, 1024
        $region40: #{tpu_custom_call.1} parent=35 // pred_fallthru
          _
        // Predicated region
        $region41: #{tpu_custom_call.1} parent=35 // pred_check
          %p218 = pneg %p65
        $region42: #{tpu_custom_call.1} parent=35 // pred_check_branch
          %220 = sbr.rel (%p218) target = $region44
        $region43: #{tpu_custom_call.1} parent=35 // pred_region
          %221 = dma.done [#allocation7], 640
        $region44: #{tpu_custom_call.1} parent=35 // pred_fallthru
          _
        // Predicated region
        $region45: #{tpu_custom_call.1} parent=35 // pred_check
          %p222 = pneg %p86
        $region46: #{tpu_custom_call.1} parent=35 // pred_check_branch
          %224 = sbr.rel (%p222) target = $region48
        $region47: #{tpu_custom_call.1} parent=35 // pred_region
          %225 = dma.done [#allocation7], 640
        $region48: #{tpu_custom_call.1} parent=35 // pred_fallthru
          _
        %s226 = sand.u32 %s31, 1
        %s227 = scalar_lea.sflag [#allocation4], %s226
        %s228 = sand.u32 %s31, 1
        %s229 = smul.addr %s228, 64
        %s230 = scalar_lea.vmem [#allocation3], %s229
        %p231 = pneg %p44
        %p232 = pneg %p41
        %p233 = pneg %p65
        %p234 = pneg %p62
        %p235 = pneg %p86
        %p236 = pneg %p83
        %p237 = pneg %p107
        %p238 = pneg %p104
        %p239 = pneg %p133
        %p240 = pneg %p130
        %s241 = sand.u32 %s120, 1
        %s242 = scalar_lea.sflag [#allocation5], %s241
        %s243 = sand.u32 %s120, 1
        %s244 = smul.addr %s243, 64
        %s245 = scalar_lea.vmem [#allocation9], %s244
        %s246 = sld [smem:[#allocation2]]
        %v247 = vld [vmem:[#allocation6] sm:$0xff]
        %v248 = vld [vmem:[#allocation6 + $0x8] sm:$0xff]
        %v249 = vld [vmem:[#allocation6 + $0x10] sm:$0xff]
        %v250 = vld [vmem:[#allocation6 + $0x18] sm:$0xff]
        %v251 = vld [vmem:[#allocation6 + $0x20] sm:$0xff]
        %v252 = vld [vmem:[#allocation8] sm:$0xff]
        %v253 = vld [vmem:[#allocation8 + $0x8] sm:$0xff]
        %v254 = vld [vmem:[#allocation8 + $0x10] sm:$0xff]
        %v255 = vld [vmem:[#allocation8 + $0x18] sm:$0xff]
        %v256 = vld [vmem:[#allocation8 + $0x20] sm:$0xff]
        %v257 = vld [vmem:[%s213] sm:$0xff]
        %v258 = vld [vmem:[%s213 + $0x8] sm:$0xff]
        %v259 = vld [vmem:[%s213 + $0x10] sm:$0xff]
        %v260 = vld [vmem:[%s213 + $0x18] sm:$0xff]
        %v261 = vld [vmem:[%s213 + $0x20] sm:$0xff]
        %v262 = vld [vmem:[%s213 + $0x28] sm:$0xff]
        %v263 = vld [vmem:[%s213 + $0x30] sm:$0xff]
        %v264 = vld [vmem:[%s213 + $0x38] sm:$0xff]
        %266 = vset.pattern.permute.xlu0 0
        %267 = vperm.xlu0 %266, %v252
        %v268 = vpop.permute.xlu0 %267
        %271 = vset.pattern.permute.xlu0 0
        %272 = vperm.xlu0 %271, %v253
        %v273 = vpop.permute.xlu0 %272
        %276 = vset.pattern.permute.xlu0 0
        %277 = vperm.xlu0 %276, %v254
        %v278 = vpop.permute.xlu0 %277
        %281 = vset.pattern.permute.xlu0 0
        %282 = vperm.xlu0 %281, %v255
        %v283 = vpop.permute.xlu0 %282
        %286 = vset.pattern.permute.xlu0 0
        %287 = vperm.xlu0 %286, %v256
        %v288 = vpop.permute.xlu0 %287
        %vm290 = vcmask 261120
        %v292 = vsel %vm290, %v247, 0
        %v295 = vsel %vm290, %v248, 0
        %v298 = vsel %vm290, %v249, 0
        %v301 = vsel %vm290, %v250, 0
        %v304 = vsel %vm290, %v251, 0
        %306 = vmatprep.subr.mxu0 %v258
        %307 = vmatpush1.msra.mxu0 %v257
        %308 = vmatprep.subr.mxu0 %v260
        %309 = vmatpush1.msra.mxu0 %v259
        %310 = vmatprep.subr.mxu0 %v262
        %311 = vmatpush1.msra.mxu0 %v261
        %312 = vmatprep.subr.mxu0 %v264
        %313 = vmatpush1.msra.mxu0 %v263
        %314 = vmatprep.subr.mxu0 0.0
        %315 = vmatpush1.msra.mxu0 0.0
        %316 = vmatprep.subr.mxu0 0.0
        %317 = vmatpush1.msra.mxu0 0.0
        %318 = vmatprep.subr.mxu0 0.0
        %319 = vmatpush1.msra.mxu0 0.0
        %320 = vmatprep.subr.mxu0 0.0
        %321 = vmatpush1.msra.mxu0 0.0
        %322 = vmatprep.subr.mxu0 0.0
        %323 = vmatpush1.msra.mxu0 0.0
        %324 = vmatprep.subr.mxu0 0.0
        %325 = vmatpush1.msra.mxu0 0.0
        %326 = vmatprep.subr.mxu0 0.0
        %327 = vmatpush1.msra.mxu0 0.0
        %328 = vmatprep.subr.mxu0 0.0
        %329 = vmatpush1.msra.mxu0 0.0
        %330 = vmatprep.subr.mxu0 0.0
        %331 = vmatpush1.msra.mxu0 0.0
        %332 = vmatprep.subr.mxu0 0.0
        %333 = vmatpush1.msra.mxu0 0.0
        %334 = vmatprep.subr.mxu0 0.0
        %335 = vmatpush1.msra.mxu0 0.0
        %336 = vmatprep.subr.mxu0 0.0
        %337 = vmatpush1.msra.mxu0 0.0
        %338 = vmatprep.subr.mxu0 0.0
        %339 = vmatpush1.msra.mxu0 0.0
        %340 = vmatprep.subr.mxu0 0.0
        %341 = vmatpush1.msra.mxu0 0.0
        %342 = vmatprep.subr.mxu0 0.0
        %343 = vmatpush1.msra.mxu0 0.0
        %344 = vmatprep.subr.mxu0 0.0
        %345 = vmatpush1.msra.mxu0 0.0
        %346 = vmatprep.subr.mxu0 0.0
        %347 = vmatpush1.msra.mxu0 0.0
        %348 = vmatprep.subr.mxu0 0.0
        %349 = vmatpush1.msra.mxu0 0.0
        %350 = vmatprep.subr.mxu0 0.0
        %351 = vmatpush1.msra.mxu0 0.0
        %352 = vmatprep.subr.mxu0 0.0
        %353 = vmatpush1.msra.mxu0 0.0
        %354 = vmatprep.subr.mxu0 0.0
        %355 = vmatpush1.msra.mxu0 0.0
        %356 = vmatprep.subr.mxu0 0.0
        %357 = vmatpush1.msra.mxu0 0.0
        %358 = vmatprep.subr.mxu0 0.0
        %359 = vmatpush1.msra.mxu0 0.0
        %360 = vmatprep.subr.mxu0 0.0
        %361 = vmatpush1.msra.mxu0 0.0
        %362 = vmatprep.subr.mxu0 0.0
        %363 = vmatpush1.msra.mxu0 0.0
        %364 = vmatprep.subr.mxu0 0.0
        %365 = vmatpush1.msra.mxu0 0.0
        %366 = vmatprep.subr.mxu0 0.0
        %367 = vmatpush1.msra.mxu0 0.0
        %368 = vmatprep.subr.mxu0 0.0
        %369 = vmatpush1.msra.mxu0 0.0
        %370 = vmatprep.mubr.f32.mxu0 0.0
        %371 = vmatmul.mubr.f32.gmra.mrb[0].mxu0 %v292
        %v372 = vpop.f32.mrb[0].mxu0
        %v373 = vadd.f32 %v268, %v372
        %v374 = vpop.f32.mrb[0].mxu0
        %v375 = vadd.f32 %v268, %v374
        %376 = vmatprep.mubr.f32.mxu0 0.0
        %377 = vmatmul.mubr.f32.gmra.mrb[0].mxu0 %v295
        %v378 = vpop.f32.mrb[0].mxu0
        %v379 = vadd.f32 %v273, %v378
        %v380 = vpop.f32.mrb[0].mxu0
        %v381 = vadd.f32 %v273, %v380
        %382 = vmatprep.mubr.f32.mxu0 0.0
        %383 = vmatmul.mubr.f32.gmra.mrb[0].mxu0 %v298
        %v384 = vpop.f32.mrb[0].mxu0
        %v385 = vadd.f32 %v278, %v384
        %v386 = vpop.f32.mrb[0].mxu0
        %v387 = vadd.f32 %v278, %v386
        %388 = vmatprep.mubr.f32.mxu0 0.0
        %389 = vmatmul.mubr.f32.gmra.mrb[0].mxu0 %v301
        %v390 = vpop.f32.mrb[0].mxu0
        %v391 = vadd.f32 %v283, %v390
        %v392 = vpop.f32.mrb[0].mxu0
        %v393 = vadd.f32 %v283, %v392
        %394 = vmatprep.mubr.f32.mxu0 0.0
        %395 = vmatmul.mubr.f32.gmra.mrb[0].mxu0 %v304
        %v396 = vpop.f32.mrb[0].mxu0
        %v397 = vadd.f32 %v288, %v396
        %v398 = vpop.f32.mrb[0].mxu0
        %v399 = vadd.f32 %v288, %v398
        %400 = vdwg.mxu0
        %401 = vxpose.xlu0.b32.start [1/16] %v373, 128
        %402 = vxpose.xlu0.b32.cont [2/16] 0.0, 128
        %403 = vxpose.xlu0.b32.cont [3/16] 0.0, 128
        %404 = vxpose.xlu0.b32.cont [4/16] 0.0, 128
        %405 = vxpose.xlu0.b32.cont [5/16] 0.0, 128
        %406 = vxpose.xlu0.b32.cont [6/16] 0.0, 128
        %407 = vxpose.xlu0.b32.cont [7/16] 0.0, 128
        %408 = vxpose.xlu0.b32.cont [8/16] 0.0, 128
        %409 = vxpose.xlu0.b32.cont [9/16] 0.0, 128
        %410 = vxpose.xlu0.b32.cont [10/16] 0.0, 128
        %411 = vxpose.xlu0.b32.cont [11/16] 0.0, 128
        %412 = vxpose.xlu0.b32.cont [12/16] 0.0, 128
        %413 = vxpose.xlu0.b32.cont [13/16] 0.0, 128
        %414 = vxpose.xlu0.b32.cont [14/16] 0.0, 128
        %415 = vxpose.xlu0.b32.cont [15/16] 0.0, 128
        %416 = vxpose.xlu0.b32.end [16/16] 0.0, 128
        %v417 = vpop.trf.xlu0
        %v418 = vpop.trf.xlu0
        %v419 = vpop.trf.xlu0
        %v420 = vpop.trf.xlu0
        %v421 = vpop.trf.xlu0
        %v422 = vpop.trf.xlu0
        %v423 = vpop.trf.xlu0
        %v424 = vpop.trf.xlu0
        %v425 = vpop.trf.xlu0
        %v426 = vpop.trf.xlu0
        %v427 = vpop.trf.xlu0
        %v428 = vpop.trf.xlu0
        %v429 = vpop.trf.xlu0
        %v430 = vpop.trf.xlu0
        %v431 = vpop.trf.xlu0
        %v432 = vpop.trf.xlu0
        %433 = vxpose.xlu0.b32.start [1/16] %v375, 128
        %434 = vxpose.xlu0.b32.cont [2/16] 0.0, 128
        %435 = vxpose.xlu0.b32.cont [3/16] 0.0, 128
        %436 = vxpose.xlu0.b32.cont [4/16] 0.0, 128
        %437 = vxpose.xlu0.b32.cont [5/16] 0.0, 128
        %438 = vxpose.xlu0.b32.cont [6/16] 0.0, 128
        %439 = vxpose.xlu0.b32.cont [7/16] 0.0, 128
        %440 = vxpose.xlu0.b32.cont [8/16] 0.0, 128
        %441 = vxpose.xlu0.b32.cont [9/16] 0.0, 128
        %442 = vxpose.xlu0.b32.cont [10/16] 0.0, 128
        %443 = vxpose.xlu0.b32.cont [11/16] 0.0, 128
        %444 = vxpose.xlu0.b32.cont [12/16] 0.0, 128
        %445 = vxpose.xlu0.b32.cont [13/16] 0.0, 128
        %446 = vxpose.xlu0.b32.cont [14/16] 0.0, 128
        %447 = vxpose.xlu0.b32.cont [15/16] 0.0, 128
        %448 = vxpose.xlu0.b32.end [16/16] 0.0, 128
        %v449 = vpop.trf.xlu0
        %v450 = vpop.trf.xlu0
        %v451 = vpop.trf.xlu0
        %v452 = vpop.trf.xlu0
        %v453 = vpop.trf.xlu0
        %v454 = vpop.trf.xlu0
        %v455 = vpop.trf.xlu0
        %v456 = vpop.trf.xlu0
        %v457 = vpop.trf.xlu0
        %v458 = vpop.trf.xlu0
        %v459 = vpop.trf.xlu0
        %v460 = vpop.trf.xlu0
        %v461 = vpop.trf.xlu0
        %v462 = vpop.trf.xlu0
        %v463 = vpop.trf.xlu0
        %v464 = vpop.trf.xlu0
        %v467 = vrot.slane %v373, 4
        %v468 = vrot.slane %v375, 4
        %vm469 = vcmask 31744
        %v471 = vsel %vm469, %v417, 0
        %v474 = vsel %vm469, %v418, 0
        %v477 = vsel %vm469, %v419, 0
        %v480 = vsel %vm469, %v420, 0
        %v483 = vsel %vm469, %v421, 0
        %v486 = vsel %vm469, %v422, 0
        %v489 = vsel %vm469, %v423, 0
        %v492 = vsel %vm469, %v424, 0
        %v495 = vsel %vm469, %v425, 0
        %v498 = vsel %vm469, %v426, 0
        %v501 = vsel %vm469, %v427, 0
        %v504 = vsel %vm469, %v428, 0
        %v507 = vsel %vm469, %v429, 0
        %v510 = vsel %vm469, %v430, 0
        %v513 = vsel %vm469, %v431, 0
        %v516 = vsel %vm469, %v432, 0
        %v519 = vsel %vm469, %v449, 0
        %v522 = vsel %vm469, %v450, 0
        %v525 = vsel %vm469, %v451, 0
        %v528 = vsel %vm469, %v452, 0
        %v531 = vsel %vm469, %v453, 0
        %v534 = vsel %vm469, %v454, 0
        %v537 = vsel %vm469, %v455, 0
        %v540 = vsel %vm469, %v456, 0
        %v543 = vsel %vm469, %v457, 0
        %v546 = vsel %vm469, %v458, 0
        %v549 = vsel %vm469, %v459, 0
        %v552 = vsel %vm469, %v460, 0
        %v555 = vsel %vm469, %v461, 0
        %v558 = vsel %vm469, %v462, 0
        %v561 = vsel %vm469, %v463, 0
        %v564 = vsel %vm469, %v464, 0
        %vm566 = vcmask 1043456
        %v567 = vsel %vm566, %v467, 0
        %v569 = vsel %vm566, %v468, 0
        %571 = vmatprep.subr.mxu0 %v569
        %572 = vmatpush1.msra.mxu0 %v567
        %573 = vmatprep.subr.mxu0 0.0
        %574 = vmatpush1.msra.mxu0 0.0
        %575 = vmatprep.subr.mxu0 0.0
        %576 = vmatpush1.msra.mxu0 0.0
        %577 = vmatprep.subr.mxu0 0.0
        %578 = vmatpush1.msra.mxu0 0.0
        %579 = vmatprep.subr.mxu0 0.0
        %580 = vmatpush1.msra.mxu0 0.0
        %581 = vmatprep.subr.mxu0 0.0
        %582 = vmatpush1.msra.mxu0 0.0
        %583 = vmatprep.subr.mxu0 0.0
        %584 = vmatpush1.msra.mxu0 0.0
        %585 = vmatprep.subr.mxu0 0.0
        %586 = vmatpush1.msra.mxu0 0.0
        %587 = vmatprep.subr.mxu0 0.0
        %588 = vmatpush1.msra.mxu0 0.0
        %589 = vmatprep.subr.mxu0 0.0
        %590 = vmatpush1.msra.mxu0 0.0
        %591 = vmatprep.subr.mxu0 0.0
        %592 = vmatpush1.msra.mxu0 0.0
        %593 = vmatprep.subr.mxu0 0.0
        %594 = vmatpush1.msra.mxu0 0.0
        %595 = vmatprep.subr.mxu0 0.0
        %596 = vmatpush1.msra.mxu0 0.0
        %597 = vmatprep.subr.mxu0 0.0
        %598 = vmatpush1.msra.mxu0 0.0
        %599 = vmatprep.subr.mxu0 0.0
        %600 = vmatpush1.msra.mxu0 0.0
        %601 = vmatprep.subr.mxu0 0.0
        %602 = vmatpush1.msra.mxu0 0.0
        %603 = vmatprep.subr.mxu0 0.0
        %604 = vmatpush1.msra.mxu0 0.0
        %605 = vmatprep.subr.mxu0 0.0
        %606 = vmatpush1.msra.mxu0 0.0
        %607 = vmatprep.subr.mxu0 0.0
        %608 = vmatpush1.msra.mxu0 0.0
        %609 = vmatprep.subr.mxu0 0.0
        %610 = vmatpush1.msra.mxu0 0.0
        %611 = vmatprep.subr.mxu0 0.0
        %612 = vmatpush1.msra.mxu0 0.0
        %613 = vmatprep.subr.mxu0 0.0
        %614 = vmatpush1.msra.mxu0 0.0
        %615 = vmatprep.subr.mxu0 0.0
        %616 = vmatpush1.msra.mxu0 0.0
        %617 = vmatprep.subr.mxu0 0.0
        %618 = vmatpush1.msra.mxu0 0.0
        %619 = vmatprep.subr.mxu0 0.0
        %620 = vmatpush1.msra.mxu0 0.0
        %621 = vmatprep.subr.mxu0 0.0
        %622 = vmatpush1.msra.mxu0 0.0
        %623 = vmatprep.subr.mxu0 0.0
        %624 = vmatpush1.msra.mxu0 0.0
        %625 = vmatprep.subr.mxu0 0.0
        %626 = vmatpush1.msra.mxu0 0.0
        %627 = vmatprep.subr.mxu0 0.0
        %628 = vmatpush1.msra.mxu0 0.0
        %629 = vmatprep.subr.mxu0 0.0
        %630 = vmatpush1.msra.mxu0 0.0
        %631 = vmatprep.subr.mxu0 0.0
        %632 = vmatpush1.msra.mxu0 0.0
        %633 = vmatprep.subr.mxu0 0.0
        %634 = vmatpush1.msra.mxu0 0.0
        %635 = vmatprep.mubr.f32.mxu0 0.0
        %636 = vmatmul.mubr.f32.gmra.mrb[0].mxu0 %v471
        %v637 = vpop.f32.mrb[0].mxu0
        %v638 = vadd.f32 0.0, %v637
        %v639 = vpop.f32.mrb[0].mxu0
        %v640 = vadd.f32 0.0, %v639
        %641 = vmatprep.mubr.f32.mxu0 0.0
        %642 = vmatmul.mubr.f32.gmra.mrb[0].mxu0 %v474
        %v643 = vpop.f32.mrb[0].mxu0
        %v644 = vadd.f32 0.0, %v643
        %v645 = vpop.f32.mrb[0].mxu0
        %v646 = vadd.f32 0.0, %v645
        %647 = vmatprep.mubr.f32.mxu0 0.0
        %648 = vmatmul.mubr.f32.gmra.mrb[0].mxu0 %v477
        %v649 = vpop.f32.mrb[0].mxu0
        %v650 = vadd.f32 0.0, %v649
        %v651 = vpop.f32.mrb[0].mxu0
        %v652 = vadd.f32 0.0, %v651
        %653 = vmatprep.mubr.f32.mxu0 0.0
        %654 = vmatmul.mubr.f32.gmra.mrb[0].mxu0 %v480
        %v655 = vpop.f32.mrb[0].mxu0
        %v656 = vadd.f32 0.0, %v655
        %v657 = vpop.f32.mrb[0].mxu0
        %v658 = vadd.f32 0.0, %v657
        %659 = vmatprep.mubr.f32.mxu0 0.0
        %660 = vmatmul.mubr.f32.gmra.mrb[0].mxu0 %v483
        %v661 = vpop.f32.mrb[0].mxu0
        %v662 = vadd.f32 0.0, %v661
        %v663 = vpop.f32.mrb[0].mxu0
        %v664 = vadd.f32 0.0, %v663
        %665 = vmatprep.mubr.f32.mxu0 0.0
        %666 = vmatmul.mubr.f32.gmra.mrb[0].mxu0 %v486
        %v667 = vpop.f32.mrb[0].mxu0
        %v668 = vadd.f32 0.0, %v667
        %v669 = vpop.f32.mrb[0].mxu0
        %v670 = vadd.f32 0.0, %v669
        %671 = vmatprep.mubr.f32.mxu0 0.0
        %672 = vmatmul.mubr.f32.gmra.mrb[0].mxu0 %v489
        %v673 = vpop.f32.mrb[0].mxu0
        %v674 = vadd.f32 0.0, %v673
        %v675 = vpop.f32.mrb[0].mxu0
        %v676 = vadd.f32 0.0, %v675
        %677 = vmatprep.mubr.f32.mxu0 0.0
        %678 = vmatmul.mubr.f32.gmra.mrb[0].mxu0 %v492
        %v679 = vpop.f32.mrb[0].mxu0
        %v680 = vadd.f32 0.0, %v679
        %v681 = vpop.f32.mrb[0].mxu0
        %v682 = vadd.f32 0.0, %v681
        %683 = vmatprep.mubr.f32.mxu0 0.0
        %684 = vmatmul.mubr.f32.gmra.mrb[0].mxu0 %v495
        %v685 = vpop.f32.mrb[0].mxu0
        %v686 = vadd.f32 0.0, %v685
        %v687 = vpop.f32.mrb[0].mxu0
        %v688 = vadd.f32 0.0, %v687
        %689 = vmatprep.mubr.f32.mxu0 0.0
        %690 = vmatmul.mubr.f32.gmra.mrb[0].mxu0 %v498
        %v691 = vpop.f32.mrb[0].mxu0
        %v692 = vadd.f32 0.0, %v691
        %v693 = vpop.f32.mrb[0].mxu0
        %v694 = vadd.f32 0.0, %v693
        %695 = vmatprep.mubr.f32.mxu0 0.0
        %696 = vmatmul.mubr.f32.gmra.mrb[0].mxu0 %v501
        %v697 = vpop.f32.mrb[0].mxu0
        %v698 = vadd.f32 0.0, %v697
        %v699 = vpop.f32.mrb[0].mxu0
        %v700 = vadd.f32 0.0, %v699
        %701 = vmatprep.mubr.f32.mxu0 0.0
        %702 = vmatmul.mubr.f32.gmra.mrb[0].mxu0 %v504
        %v703 = vpop.f32.mrb[0].mxu0
        %v704 = vadd.f32 0.0, %v703
        %v705 = vpop.f32.mrb[0].mxu0
        %v706 = vadd.f32 0.0, %v705
        %707 = vmatprep.mubr.f32.mxu0 0.0
        %708 = vmatmul.mubr.f32.gmra.mrb[0].mxu0 %v507
        %v709 = vpop.f32.mrb[0].mxu0
        %v710 = vadd.f32 0.0, %v709
        %v711 = vpop.f32.mrb[0].mxu0
        %v712 = vadd.f32 0.0, %v711
        %713 = vmatprep.mubr.f32.mxu0 0.0
        %714 = vmatmul.mubr.f32.gmra.mrb[0].mxu0 %v510
        %v715 = vpop.f32.mrb[0].mxu0
        %v716 = vadd.f32 0.0, %v715
        %v717 = vpop.f32.mrb[0].mxu0
        %v718 = vadd.f32 0.0, %v717
        %719 = vmatprep.mubr.f32.mxu0 0.0
        %720 = vmatmul.mubr.f32.gmra.mrb[0].mxu0 %v513
        %v721 = vpop.f32.mrb[0].mxu0
        %v722 = vadd.f32 0.0, %v721
        %v723 = vpop.f32.mrb[0].mxu0
        %v724 = vadd.f32 0.0, %v723
        %725 = vmatprep.mubr.f32.mxu0 0.0
        %726 = vmatmul.mubr.f32.gmra.mrb[0].mxu0 %v516
        %v727 = vpop.f32.mrb[0].mxu0
        %v728 = vadd.f32 0.0, %v727
        %v729 = vpop.f32.mrb[0].mxu0
        %v730 = vadd.f32 0.0, %v729
        %731 = vmatprep.mubr.f32.mxu0 0.0
        %732 = vmatmul.mubr.f32.gmra.mrb[0].mxu0 %v519
        %v733 = vpop.f32.mrb[0].mxu0
        %v734 = vadd.f32 0.0, %v733
        %v735 = vpop.f32.mrb[0].mxu0
        %v736 = vadd.f32 0.0, %v735
        %737 = vmatprep.mubr.f32.mxu0 0.0
        %738 = vmatmul.mubr.f32.gmra.mrb[0].mxu0 %v522
        %v739 = vpop.f32.mrb[0].mxu0
        %v740 = vadd.f32 0.0, %v739
        %v741 = vpop.f32.mrb[0].mxu0
        %v742 = vadd.f32 0.0, %v741
        %743 = vmatprep.mubr.f32.mxu0 0.0
        %744 = vmatmul.mubr.f32.gmra.mrb[0].mxu0 %v525
        %v745 = vpop.f32.mrb[0].mxu0
        %v746 = vadd.f32 0.0, %v745
        %v747 = vpop.f32.mrb[0].mxu0
        %v748 = vadd.f32 0.0, %v747
        %749 = vmatprep.mubr.f32.mxu0 0.0
        %750 = vmatmul.mubr.f32.gmra.mrb[0].mxu0 %v528
        %v751 = vpop.f32.mrb[0].mxu0
        %v752 = vadd.f32 0.0, %v751
        %v753 = vpop.f32.mrb[0].mxu0
        %v754 = vadd.f32 0.0, %v753
        %755 = vmatprep.mubr.f32.mxu0 0.0
        %756 = vmatmul.mubr.f32.gmra.mrb[0].mxu0 %v531
        %v757 = vpop.f32.mrb[0].mxu0
        %v758 = vadd.f32 0.0, %v757
        %v759 = vpop.f32.mrb[0].mxu0
        %v760 = vadd.f32 0.0, %v759
        %761 = vmatprep.mubr.f32.mxu0 0.0
        %762 = vmatmul.mubr.f32.gmra.mrb[0].mxu0 %v534
        %v763 = vpop.f32.mrb[0].mxu0
        %v764 = vadd.f32 0.0, %v763
        %v765 = vpop.f32.mrb[0].mxu0
        %v766 = vadd.f32 0.0, %v765
        %767 = vmatprep.mubr.f32.mxu0 0.0
        %768 = vmatmul.mubr.f32.gmra.mrb[0].mxu0 %v537
        %v769 = vpop.f32.mrb[0].mxu0
        %v770 = vadd.f32 0.0, %v769
        %v771 = vpop.f32.mrb[0].mxu0
        %v772 = vadd.f32 0.0, %v771
        %773 = vmatprep.mubr.f32.mxu0 0.0
        %774 = vmatmul.mubr.f32.gmra.mrb[0].mxu0 %v540
        %v775 = vpop.f32.mrb[0].mxu0
        %v776 = vadd.f32 0.0, %v775
        %v777 = vpop.f32.mrb[0].mxu0
        %v778 = vadd.f32 0.0, %v777
        %779 = vmatprep.mubr.f32.mxu0 0.0
        %780 = vmatmul.mubr.f32.gmra.mrb[0].mxu0 %v543
        %v781 = vpop.f32.mrb[0].mxu0
        %v782 = vadd.f32 0.0, %v781
        %v783 = vpop.f32.mrb[0].mxu0
        %v784 = vadd.f32 0.0, %v783
        %785 = vmatprep.mubr.f32.mxu0 0.0
        %786 = vmatmul.mubr.f32.gmra.mrb[0].mxu0 %v546
        %v787 = vpop.f32.mrb[0].mxu0
        %v788 = vadd.f32 0.0, %v787
        %v789 = vpop.f32.mrb[0].mxu0
        %v790 = vadd.f32 0.0, %v789
        %791 = vmatprep.mubr.f32.mxu0 0.0
        %792 = vmatmul.mubr.f32.gmra.mrb[0].mxu0 %v549
        %v793 = vpop.f32.mrb[0].mxu0
        %v794 = vadd.f32 0.0, %v793
        %v795 = vpop.f32.mrb[0].mxu0
        %v796 = vadd.f32 0.0, %v795
        %797 = vmatprep.mubr.f32.mxu0 0.0
        %798 = vmatmul.mubr.f32.gmra.mrb[0].mxu0 %v552
        %v799 = vpop.f32.mrb[0].mxu0
        %v800 = vadd.f32 0.0, %v799
        %v801 = vpop.f32.mrb[0].mxu0
        %v802 = vadd.f32 0.0, %v801
        %803 = vmatprep.mubr.f32.mxu0 0.0
        %804 = vmatmul.mubr.f32.gmra.mrb[0].mxu0 %v555
        %v805 = vpop.f32.mrb[0].mxu0
        %v806 = vadd.f32 0.0, %v805
        %v807 = vpop.f32.mrb[0].mxu0
        %v808 = vadd.f32 0.0, %v807
        %809 = vmatprep.mubr.f32.mxu0 0.0
        %810 = vmatmul.mubr.f32.gmra.mrb[0].mxu0 %v558
        %v811 = vpop.f32.mrb[0].mxu0
        %v812 = vadd.f32 0.0, %v811
        %v813 = vpop.f32.mrb[0].mxu0
        %v814 = vadd.f32 0.0, %v813
        %815 = vmatprep.mubr.f32.mxu0 0.0
        %816 = vmatmul.mubr.f32.gmra.mrb[0].mxu0 %v561
        %v817 = vpop.f32.mrb[0].mxu0
        %v818 = vadd.f32 0.0, %v817
        %v819 = vpop.f32.mrb[0].mxu0
        %v820 = vadd.f32 0.0, %v819
        %821 = vmatprep.mubr.f32.mxu0 0.0
        %822 = vmatmul.mubr.f32.gmra.mrb[0].mxu0 %v564
        %v823 = vpop.f32.mrb[0].mxu0
        %v824 = vadd.f32 0.0, %v823
        %v825 = vpop.f32.mrb[0].mxu0
        %v826 = vadd.f32 0.0, %v825
        %827 = vdwg.mxu0
        %v828 = vmax.f32 %v638, %v640
        %829 = vmax.xlane.f32.xlu0 %v828
        %v830 = vpop.xlane.xlu0 %829
        %v831 = vmax.f32 %v644, %v646
        %832 = vmax.xlane.f32.xlu0 %v831
        %v833 = vpop.xlane.xlu0 %832
        %v834 = vmax.f32 %v650, %v652
        %835 = vmax.xlane.f32.xlu0 %v834
        %v836 = vpop.xlane.xlu0 %835
        %v837 = vmax.f32 %v656, %v658
        %838 = vmax.xlane.f32.xlu0 %v837
        %v839 = vpop.xlane.xlu0 %838
        %v840 = vmax.f32 %v662, %v664
        %841 = vmax.xlane.f32.xlu0 %v840
        %v842 = vpop.xlane.xlu0 %841
        %v843 = vmax.f32 %v668, %v670
        %844 = vmax.xlane.f32.xlu0 %v843
        %v845 = vpop.xlane.xlu0 %844
        %v846 = vmax.f32 %v674, %v676
        %847 = vmax.xlane.f32.xlu0 %v846
        %v848 = vpop.xlane.xlu0 %847
        %v849 = vmax.f32 %v680, %v682
        %850 = vmax.xlane.f32.xlu0 %v849
        %v851 = vpop.xlane.xlu0 %850
        %v852 = vmax.f32 %v686, %v688
        %853 = vmax.xlane.f32.xlu0 %v852
        %v854 = vpop.xlane.xlu0 %853
        %v855 = vmax.f32 %v692, %v694
        %856 = vmax.xlane.f32.xlu0 %v855
        %v857 = vpop.xlane.xlu0 %856
        %v858 = vmax.f32 %v698, %v700
        %859 = vmax.xlane.f32.xlu0 %v858
        %v860 = vpop.xlane.xlu0 %859
        %v861 = vmax.f32 %v704, %v706
        %862 = vmax.xlane.f32.xlu0 %v861
        %v863 = vpop.xlane.xlu0 %862
        %v864 = vmax.f32 %v710, %v712
        %865 = vmax.xlane.f32.xlu0 %v864
        %v866 = vpop.xlane.xlu0 %865
        %v867 = vmax.f32 %v716, %v718
        %868 = vmax.xlane.f32.xlu0 %v867
        %v869 = vpop.xlane.xlu0 %868
        %v870 = vmax.f32 %v722, %v724
        %871 = vmax.xlane.f32.xlu0 %v870
        %v872 = vpop.xlane.xlu0 %871
        %v873 = vmax.f32 %v728, %v730
        %874 = vmax.xlane.f32.xlu0 %v873
        %v875 = vpop.xlane.xlu0 %874
        %v876 = vmax.f32 %v734, %v736
        %877 = vmax.xlane.f32.xlu0 %v876
        %v878 = vpop.xlane.xlu0 %877
        %v879 = vmax.f32 %v740, %v742
        %880 = vmax.xlane.f32.xlu0 %v879
        %v881 = vpop.xlane.xlu0 %880
        %v882 = vmax.f32 %v746, %v748
        %883 = vmax.xlane.f32.xlu0 %v882
        %v884 = vpop.xlane.xlu0 %883
        %v885 = vmax.f32 %v752, %v754
        %886 = vmax.xlane.f32.xlu0 %v885
        %v887 = vpop.xlane.xlu0 %886
        %v888 = vmax.f32 %v758, %v760
        %889 = vmax.xlane.f32.xlu0 %v888
        %v890 = vpop.xlane.xlu0 %889
        %v891 = vmax.f32 %v764, %v766
        %892 = vmax.xlane.f32.xlu0 %v891
        %v893 = vpop.xlane.xlu0 %892
        %v894 = vmax.f32 %v770, %v772
        %895 = vmax.xlane.f32.xlu0 %v894
        %v896 = vpop.xlane.xlu0 %895
        %v897 = vmax.f32 %v776, %v778
        %898 = vmax.xlane.f32.xlu0 %v897
        %v899 = vpop.xlane.xlu0 %898
        %v900 = vmax.f32 %v782, %v784
        %901 = vmax.xlane.f32.xlu0 %v900
        %v902 = vpop.xlane.xlu0 %901
        %v903 = vmax.f32 %v788, %v790
        %904 = vmax.xlane.f32.xlu0 %v903
        %v905 = vpop.xlane.xlu0 %904
        %v906 = vmax.f32 %v794, %v796
        %907 = vmax.xlane.f32.xlu0 %v906
        %v908 = vpop.xlane.xlu0 %907
        %v909 = vmax.f32 %v800, %v802
        %910 = vmax.xlane.f32.xlu0 %v909
        %v911 = vpop.xlane.xlu0 %910
        %v912 = vmax.f32 %v806, %v808
        %913 = vmax.xlane.f32.xlu0 %v912
        %v914 = vpop.xlane.xlu0 %913
        %v915 = vmax.f32 %v812, %v814
        %916 = vmax.xlane.f32.xlu0 %v915
        %v917 = vpop.xlane.xlu0 %916
        %v918 = vmax.f32 %v818, %v820
        %919 = vmax.xlane.f32.xlu0 %v918
        %v920 = vpop.xlane.xlu0 %919
        %v921 = vmax.f32 %v824, %v826
        %922 = vmax.xlane.f32.xlu0 %v921
        %v923 = vpop.xlane.xlu0 %922
        %v924 = vsub.f32 %v638, %v830
        %v925 = vsub.f32 %v640, %v830
        %v926 = vsub.f32 %v644, %v833
        %v927 = vsub.f32 %v646, %v833
        %v928 = vsub.f32 %v650, %v836
        %v929 = vsub.f32 %v652, %v836
        %v930 = vsub.f32 %v656, %v839
        %v931 = vsub.f32 %v658, %v839
        %v932 = vsub.f32 %v662, %v842
        %v933 = vsub.f32 %v664, %v842
        %v934 = vsub.f32 %v668, %v845
        %v935 = vsub.f32 %v670, %v845
        %v936 = vsub.f32 %v674, %v848
        %v937 = vsub.f32 %v676, %v848
        %v938 = vsub.f32 %v680, %v851
        %v939 = vsub.f32 %v682, %v851
        %v940 = vsub.f32 %v686, %v854
        %v941 = vsub.f32 %v688, %v854
        %v942 = vsub.f32 %v692, %v857
        %v943 = vsub.f32 %v694, %v857
        %v944 = vsub.f32 %v698, %v860
        %v945 = vsub.f32 %v700, %v860
        %v946 = vsub.f32 %v704, %v863
        %v947 = vsub.f32 %v706, %v863
        %v948 = vsub.f32 %v710, %v866
        %v949 = vsub.f32 %v712, %v866
        %v950 = vsub.f32 %v716, %v869
        %v951 = vsub.f32 %v718, %v869
        %v952 = vsub.f32 %v722, %v872
        %v953 = vsub.f32 %v724, %v872
        %v954 = vsub.f32 %v728, %v875
        %v955 = vsub.f32 %v730, %v875
        %v956 = vsub.f32 %v734, %v878
        %v957 = vsub.f32 %v736, %v878
        %v958 = vsub.f32 %v740, %v881
        %v959 = vsub.f32 %v742, %v881
        %v960 = vsub.f32 %v746, %v884
        %v961 = vsub.f32 %v748, %v884
        %v962 = vsub.f32 %v752, %v887
        %v963 = vsub.f32 %v754, %v887
        %v964 = vsub.f32 %v758, %v890
        %v965 = vsub.f32 %v760, %v890
        %v966 = vsub.f32 %v764, %v893
        %v967 = vsub.f32 %v766, %v893
        %v968 = vsub.f32 %v770, %v896
        %v969 = vsub.f32 %v772, %v896
        %v970 = vsub.f32 %v776, %v899
        %v971 = vsub.f32 %v778, %v899
        %v972 = vsub.f32 %v782, %v902
        %v973 = vsub.f32 %v784, %v902
        %v974 = vsub.f32 %v788, %v905
        %v975 = vsub.f32 %v790, %v905
        %v976 = vsub.f32 %v794, %v908
        %v977 = vsub.f32 %v796, %v908
        %v978 = vsub.f32 %v800, %v911
        %v979 = vsub.f32 %v802, %v911
        %v980 = vsub.f32 %v806, %v914
        %v981 = vsub.f32 %v808, %v914
        %v982 = vsub.f32 %v812, %v917
        %v983 = vsub.f32 %v814, %v917
        %v984 = vsub.f32 %v818, %v920
        %v985 = vsub.f32 %v820, %v920
        %v986 = vsub.f32 %v824, %v923
        %v987 = vsub.f32 %v826, %v923
        %v988 = vmul.f32 %v924, 1.442695
        %v989 = vpow.pop %v988
        %v990 = vmul.f32 %v925, 1.442695
        %v991 = vpow.pop %v990
        %v992 = vmul.f32 %v926, 1.442695
        %v993 = vpow.pop %v992
        %v994 = vmul.f32 %v927, 1.442695
        %v995 = vpow.pop %v994
        %v996 = vmul.f32 %v928, 1.442695
        %v997 = vpow.pop %v996
        %v998 = vmul.f32 %v929, 1.442695
        %v999 = vpow.pop %v998
        %v1000 = vmul.f32 %v930, 1.442695
        %v1001 = vpow.pop %v1000
        %v1002 = vmul.f32 %v931, 1.442695
        %v1003 = vpow.pop %v1002
        %v1004 = vmul.f32 %v932, 1.442695
        %v1005 = vpow.pop %v1004
        %v1006 = vmul.f32 %v933, 1.442695
        %v1007 = vpow.pop %v1006
        %v1008 = vmul.f32 %v934, 1.442695
        %v1009 = vpow.pop %v1008
        %v1010 = vmul.f32 %v935, 1.442695
        %v1011 = vpow.pop %v1010
        %v1012 = vmul.f32 %v936, 1.442695
        %v1013 = vpow.pop %v1012
        %v1014 = vmul.f32 %v937, 1.442695
        %v1015 = vpow.pop %v1014
        %v1016 = vmul.f32 %v938, 1.442695
        %v1017 = vpow.pop %v1016
        %v1018 = vmul.f32 %v939, 1.442695
        %v1019 = vpow.pop %v1018
        %v1020 = vmul.f32 %v940, 1.442695
        %v1021 = vpow.pop %v1020
        %v1022 = vmul.f32 %v941, 1.442695
        %v1023 = vpow.pop %v1022
        %v1024 = vmul.f32 %v942, 1.442695
        %v1025 = vpow.pop %v1024
        %v1026 = vmul.f32 %v943, 1.442695
        %v1027 = vpow.pop %v1026
        %v1028 = vmul.f32 %v944, 1.442695
        %v1029 = vpow.pop %v1028
        %v1030 = vmul.f32 %v945, 1.442695
        %v1031 = vpow.pop %v1030
        %v1032 = vmul.f32 %v946, 1.442695
        %v1033 = vpow.pop %v1032
        %v1034 = vmul.f32 %v947, 1.442695
        %v1035 = vpow.pop %v1034
        %v1036 = vmul.f32 %v948, 1.442695
        %v1037 = vpow.pop %v1036
        %v1038 = vmul.f32 %v949, 1.442695
        %v1039 = vpow.pop %v1038
        %v1040 = vmul.f32 %v950, 1.442695
        %v1041 = vpow.pop %v1040
        %v1042 = vmul.f32 %v951, 1.442695
        %v1043 = vpow.pop %v1042
        %v1044 = vmul.f32 %v952, 1.442695
        %v1045 = vpow.pop %v1044
        %v1046 = vmul.f32 %v953, 1.442695
        %v1047 = vpow.pop %v1046
        %v1048 = vmul.f32 %v954, 1.442695
        %v1049 = vpow.pop %v1048
        %v1050 = vmul.f32 %v955, 1.442695
        %v1051 = vpow.pop %v1050
        %v1052 = vmul.f32 %v956, 1.442695
        %v1053 = vpow.pop %v1052
        %v1054 = vmul.f32 %v957, 1.442695
        %v1055 = vpow.pop %v1054
        %v1056 = vmul.f32 %v958, 1.442695
        %v1057 = vpow.pop %v1056
        %v1058 = vmul.f32 %v959, 1.442695
        %v1059 = vpow.pop %v1058
        %v1060 = vmul.f32 %v960, 1.442695
        %v1061 = vpow.pop %v1060
        %v1062 = vmul.f32 %v961, 1.442695
        %v1063 = vpow.pop %v1062
        %v1064 = vmul.f32 %v962, 1.442695
        %v1065 = vpow.pop %v1064
        %v1066 = vmul.f32 %v963, 1.442695
        %v1067 = vpow.pop %v1066
        %v1068 = vmul.f32 %v964, 1.442695
        %v1069 = vpow.pop %v1068
        %v1070 = vmul.f32 %v965, 1.442695
        %v1071 = vpow.pop %v1070
        %v1072 = vmul.f32 %v966, 1.442695
        %v1073 = vpow.pop %v1072
        %v1074 = vmul.f32 %v967, 1.442695
        %v1075 = vpow.pop %v1074
        %v1076 = vmul.f32 %v968, 1.442695
        %v1077 = vpow.pop %v1076
        %v1078 = vmul.f32 %v969, 1.442695
        %v1079 = vpow.pop %v1078
        %v1080 = vmul.f32 %v970, 1.442695
        %v1081 = vpow.pop %v1080
        %v1082 = vmul.f32 %v971, 1.442695
        %v1083 = vpow.pop %v1082
        %v1084 = vmul.f32 %v972, 1.442695
        %v1085 = vpow.pop %v1084
        %v1086 = vmul.f32 %v973, 1.442695
        %v1087 = vpow.pop %v1086
        %v1088 = vmul.f32 %v974, 1.442695
        %v1089 = vpow.pop %v1088
        %v1090 = vmul.f32 %v975, 1.442695
        %v1091 = vpow.pop %v1090
        %v1092 = vmul.f32 %v976, 1.442695
        %v1093 = vpow.pop %v1092
        %v1094 = vmul.f32 %v977, 1.442695
        %v1095 = vpow.pop %v1094
        %v1096 = vmul.f32 %v978, 1.442695
        %v1097 = vpow.pop %v1096
        %v1098 = vmul.f32 %v979, 1.442695
        %v1099 = vpow.pop %v1098
        %v1100 = vmul.f32 %v980, 1.442695
        %v1101 = vpow.pop %v1100
        %v1102 = vmul.f32 %v981, 1.442695
        %v1103 = vpow.pop %v1102
        %v1104 = vmul.f32 %v982, 1.442695
        %v1105 = vpow.pop %v1104
        %v1106 = vmul.f32 %v983, 1.442695
        %v1107 = vpow.pop %v1106
        %v1108 = vmul.f32 %v984, 1.442695
        %v1109 = vpow.pop %v1108
        %v1110 = vmul.f32 %v985, 1.442695
        %v1111 = vpow.pop %v1110
        %v1112 = vmul.f32 %v986, 1.442695
        %v1113 = vpow.pop %v1112
        %v1114 = vmul.f32 %v987, 1.442695
        %v1115 = vpow.pop %v1114
        %v1116 = vadd.f32 %v989, %v991
        %1117 = vadd.xlane.f32.xlu0 %v1116
        %v1118 = vpop.xlane.xlu0 %1117
        %v1119 = vadd.f32 %v993, %v995
        %1120 = vadd.xlane.f32.xlu0 %v1119
        %v1121 = vpop.xlane.xlu0 %1120
        %v1122 = vadd.f32 %v997, %v999
        %1123 = vadd.xlane.f32.xlu0 %v1122
        %v1124 = vpop.xlane.xlu0 %1123
        %v1125 = vadd.f32 %v1001, %v1003
        %1126 = vadd.xlane.f32.xlu0 %v1125
        %v1127 = vpop.xlane.xlu0 %1126
        %v1128 = vadd.f32 %v1005, %v1007
        %1129 = vadd.xlane.f32.xlu0 %v1128
        %v1130 = vpop.xlane.xlu0 %1129
        %v1131 = vadd.f32 %v1009, %v1011
        %1132 = vadd.xlane.f32.xlu0 %v1131
        %v1133 = vpop.xlane.xlu0 %1132
        %v1134 = vadd.f32 %v1013, %v1015
        %1135 = vadd.xlane.f32.xlu0 %v1134
        %v1136 = vpop.xlane.xlu0 %1135
        %v1137 = vadd.f32 %v1017, %v1019
        %1138 = vadd.xlane.f32.xlu0 %v1137
        %v1139 = vpop.xlane.xlu0 %1138
        %v1140 = vadd.f32 %v1021, %v1023
        %1141 = vadd.xlane.f32.xlu0 %v1140
        %v1142 = vpop.xlane.xlu0 %1141
        %v1143 = vadd.f32 %v1025, %v1027
        %1144 = vadd.xlane.f32.xlu0 %v1143
        %v1145 = vpop.xlane.xlu0 %1144
        %v1146 = vadd.f32 %v1029, %v1031
        %1147 = vadd.xlane.f32.xlu0 %v1146
        %v1148 = vpop.xlane.xlu0 %1147
        %v1149 = vadd.f32 %v1033, %v1035
        %1150 = vadd.xlane.f32.xlu0 %v1149
        %v1151 = vpop.xlane.xlu0 %1150
        %v1152 = vadd.f32 %v1037, %v1039
        %1153 = vadd.xlane.f32.xlu0 %v1152
        %v1154 = vpop.xlane.xlu0 %1153
        %v1155 = vadd.f32 %v1041, %v1043
        %1156 = vadd.xlane.f32.xlu0 %v1155
        %v1157 = vpop.xlane.xlu0 %1156
        %v1158 = vadd.f32 %v1045, %v1047
        %1159 = vadd.xlane.f32.xlu0 %v1158
        %v1160 = vpop.xlane.xlu0 %1159
        %v1161 = vadd.f32 %v1049, %v1051
        %1162 = vadd.xlane.f32.xlu0 %v1161
        %v1163 = vpop.xlane.xlu0 %1162
        %v1164 = vadd.f32 %v1053, %v1055
        %1165 = vadd.xlane.f32.xlu0 %v1164
        %v1166 = vpop.xlane.xlu0 %1165
        %v1167 = vadd.f32 %v1057, %v1059
        %1168 = vadd.xlane.f32.xlu0 %v1167
        %v1169 = vpop.xlane.xlu0 %1168
        %v1170 = vadd.f32 %v1061, %v1063
        %1171 = vadd.xlane.f32.xlu0 %v1170
        %v1172 = vpop.xlane.xlu0 %1171
        %v1173 = vadd.f32 %v1065, %v1067
        %1174 = vadd.xlane.f32.xlu0 %v1173
        %v1175 = vpop.xlane.xlu0 %1174
        %v1176 = vadd.f32 %v1069, %v1071
        %1177 = vadd.xlane.f32.xlu0 %v1176
        %v1178 = vpop.xlane.xlu0 %1177
        %v1179 = vadd.f32 %v1073, %v1075
        %1180 = vadd.xlane.f32.xlu0 %v1179
        %v1181 = vpop.xlane.xlu0 %1180
        %v1182 = vadd.f32 %v1077, %v1079
        %1183 = vadd.xlane.f32.xlu0 %v1182
        %v1184 = vpop.xlane.xlu0 %1183
        %v1185 = vadd.f32 %v1081, %v1083
        %1186 = vadd.xlane.f32.xlu0 %v1185
        %v1187 = vpop.xlane.xlu0 %1186
        %v1188 = vadd.f32 %v1085, %v1087
        %1189 = vadd.xlane.f32.xlu0 %v1188
        %v1190 = vpop.xlane.xlu0 %1189
        %v1191 = vadd.f32 %v1089, %v1091
        %1192 = vadd.xlane.f32.xlu0 %v1191
        %v1193 = vpop.xlane.xlu0 %1192
        %v1194 = vadd.f32 %v1093, %v1095
        %1195 = vadd.xlane.f32.xlu0 %v1194
        %v1196 = vpop.xlane.xlu0 %1195
        %v1197 = vadd.f32 %v1097, %v1099
        %1198 = vadd.xlane.f32.xlu0 %v1197
        %v1199 = vpop.xlane.xlu0 %1198
        %v1200 = vadd.f32 %v1101, %v1103
        %1201 = vadd.xlane.f32.xlu0 %v1200
        %v1202 = vpop.xlane.xlu0 %1201
        %v1203 = vadd.f32 %v1105, %v1107
        %1204 = vadd.xlane.f32.xlu0 %v1203
        %v1205 = vpop.xlane.xlu0 %1204
        %v1206 = vadd.f32 %v1109, %v1111
        %1207 = vadd.xlane.f32.xlu0 %v1206
        %v1208 = vpop.xlane.xlu0 %1207
        %v1209 = vadd.f32 %v1113, %v1115
        %1210 = vadd.xlane.f32.xlu0 %v1209
        %v1211 = vpop.xlane.xlu0 %1210
        %v1212 = vrcp.pop %v1118
        %v1213 = vrcp.pop %v1121
        %v1214 = vrcp.pop %v1124
        %v1215 = vrcp.pop %v1127
        %v1216 = vrcp.pop %v1130
        %v1217 = vrcp.pop %v1133
        %v1218 = vrcp.pop %v1136
        %v1219 = vrcp.pop %v1139
        %v1220 = vrcp.pop %v1142
        %v1221 = vrcp.pop %v1145
        %v1222 = vrcp.pop %v1148
        %v1223 = vrcp.pop %v1151
        %v1224 = vrcp.pop %v1154
        %v1225 = vrcp.pop %v1157
        %v1226 = vrcp.pop %v1160
        %v1227 = vrcp.pop %v1163
        %v1228 = vrcp.pop %v1166
        %v1229 = vrcp.pop %v1169
        %v1230 = vrcp.pop %v1172
        %v1231 = vrcp.pop %v1175
        %v1232 = vrcp.pop %v1178
        %v1233 = vrcp.pop %v1181
        %v1234 = vrcp.pop %v1184
        %v1235 = vrcp.pop %v1187
        %v1236 = vrcp.pop %v1190
        %v1237 = vrcp.pop %v1193
        %v1238 = vrcp.pop %v1196
        %v1239 = vrcp.pop %v1199
        %v1240 = vrcp.pop %v1202
        %v1241 = vrcp.pop %v1205
        %v1242 = vrcp.pop %v1208
        %v1243 = vrcp.pop %v1211
        %v1244 = vmul.f32 %v989, %v1212
        %v1245 = vmul.f32 %v991, %v1212
        %v1246 = vmul.f32 %v993, %v1213
        %v1247 = vmul.f32 %v995, %v1213
        %v1248 = vmul.f32 %v997, %v1214
        %v1249 = vmul.f32 %v999, %v1214
        %v1250 = vmul.f32 %v1001, %v1215
        %v1251 = vmul.f32 %v1003, %v1215
        %v1252 = vmul.f32 %v1005, %v1216
        %v1253 = vmul.f32 %v1007, %v1216
        %v1254 = vmul.f32 %v1009, %v1217
        %v1255 = vmul.f32 %v1011, %v1217
        %v1256 = vmul.f32 %v1013, %v1218
        %v1257 = vmul.f32 %v1015, %v1218
        %v1258 = vmul.f32 %v1017, %v1219
        %v1259 = vmul.f32 %v1019, %v1219
        %v1260 = vmul.f32 %v1021, %v1220
        %v1261 = vmul.f32 %v1023, %v1220
        %v1262 = vmul.f32 %v1025, %v1221
        %v1263 = vmul.f32 %v1027, %v1221
        %v1264 = vmul.f32 %v1029, %v1222
        %v1265 = vmul.f32 %v1031, %v1222
        %v1266 = vmul.f32 %v1033, %v1223
        %v1267 = vmul.f32 %v1035, %v1223
        %v1268 = vmul.f32 %v1037, %v1224
        %v1269 = vmul.f32 %v1039, %v1224
        %v1270 = vmul.f32 %v1041, %v1225
        %v1271 = vmul.f32 %v1043, %v1225
        %v1272 = vmul.f32 %v1045, %v1226
        %v1273 = vmul.f32 %v1047, %v1226
        %v1274 = vmul.f32 %v1049, %v1227
        %v1275 = vmul.f32 %v1051, %v1227
        %v1276 = vmul.f32 %v1053, %v1228
        %v1277 = vmul.f32 %v1055, %v1228
        %v1278 = vmul.f32 %v1057, %v1229
        %v1279 = vmul.f32 %v1059, %v1229
        %v1280 = vmul.f32 %v1061, %v1230
        %v1281 = vmul.f32 %v1063, %v1230
        %v1282 = vmul.f32 %v1065, %v1231
        %v1283 = vmul.f32 %v1067, %v1231
        %v1284 = vmul.f32 %v1069, %v1232
        %v1285 = vmul.f32 %v1071, %v1232
        %v1286 = vmul.f32 %v1073, %v1233
        %v1287 = vmul.f32 %v1075, %v1233
        %v1288 = vmul.f32 %v1077, %v1234
        %v1289 = vmul.f32 %v1079, %v1234
        %v1290 = vmul.f32 %v1081, %v1235
        %v1291 = vmul.f32 %v1083, %v1235
        %v1292 = vmul.f32 %v1085, %v1236
        %v1293 = vmul.f32 %v1087, %v1236
        %v1294 = vmul.f32 %v1089, %v1237
        %v1295 = vmul.f32 %v1091, %v1237
        %v1296 = vmul.f32 %v1093, %v1238
        %v1297 = vmul.f32 %v1095, %v1238
        %v1298 = vmul.f32 %v1097, %v1239
        %v1299 = vmul.f32 %v1099, %v1239
        %v1300 = vmul.f32 %v1101, %v1240
        %v1301 = vmul.f32 %v1103, %v1240
        %v1302 = vmul.f32 %v1105, %v1241
        %v1303 = vmul.f32 %v1107, %v1241
        %v1304 = vmul.f32 %v1109, %v1242
        %v1305 = vmul.f32 %v1111, %v1242
        %v1306 = vmul.f32 %v1113, %v1243
        %v1307 = vmul.f32 %v1115, %v1243
        %1308 = vmatprep.subr.mxu0 %v1245
        %1309 = vmatpush1.xpose.msra.mxu0 %v1244
        %1310 = vmatprep.subr.mxu0 %v1247
        %1311 = vmatpush1.xpose.msra.mxu0 %v1246
        %1312 = vmatprep.subr.mxu0 %v1249
        %1313 = vmatpush1.xpose.msra.mxu0 %v1248
        %1314 = vmatprep.subr.mxu0 %v1251
        %1315 = vmatpush1.xpose.msra.mxu0 %v1250
        %1316 = vmatprep.subr.mxu0 %v1253
        %1317 = vmatpush1.xpose.msra.mxu0 %v1252
        %1318 = vmatprep.subr.mxu0 %v1255
        %1319 = vmatpush1.xpose.msra.mxu0 %v1254
        %1320 = vmatprep.subr.mxu0 %v1257
        %1321 = vmatpush1.xpose.msra.mxu0 %v1256
        %1322 = vmatprep.subr.mxu0 %v1259
        %1323 = vmatpush1.xpose.msra.mxu0 %v1258
        %1324 = vmatprep.subr.mxu0 %v1261
        %1325 = vmatpush1.xpose.msra.mxu0 %v1260
        %1326 = vmatprep.subr.mxu0 %v1263
        %1327 = vmatpush1.xpose.msra.mxu0 %v1262
        %1328 = vmatprep.subr.mxu0 %v1265
        %1329 = vmatpush1.xpose.msra.mxu0 %v1264
        %1330 = vmatprep.subr.mxu0 %v1267
        %1331 = vmatpush1.xpose.msra.mxu0 %v1266
        %1332 = vmatprep.subr.mxu0 %v1269
        %1333 = vmatpush1.xpose.msra.mxu0 %v1268
        %1334 = vmatprep.subr.mxu0 %v1271
        %1335 = vmatpush1.xpose.msra.mxu0 %v1270
        %1336 = vmatprep.subr.mxu0 %v1273
        %1337 = vmatpush1.xpose.msra.mxu0 %v1272
        %1338 = vmatprep.subr.mxu0 %v1275
        %1339 = vmatpush1.xpose.msra.mxu0 %v1274
        %1340 = vmatprep.subr.mxu0 %v1277
        %1341 = vmatpush1.xpose.msra.mxu0 %v1276
        %1342 = vmatprep.subr.mxu0 %v1279
        %1343 = vmatpush1.xpose.msra.mxu0 %v1278
        %1344 = vmatprep.subr.mxu0 %v1281
        %1345 = vmatpush1.xpose.msra.mxu0 %v1280
        %1346 = vmatprep.subr.mxu0 %v1283
        %1347 = vmatpush1.xpose.msra.mxu0 %v1282
        %1348 = vmatprep.subr.mxu0 %v1285
        %1349 = vmatpush1.xpose.msra.mxu0 %v1284
        %1350 = vmatprep.subr.mxu0 %v1287
        %1351 = vmatpush1.xpose.msra.mxu0 %v1286
        %1352 = vmatprep.subr.mxu0 %v1289
        %1353 = vmatpush1.xpose.msra.mxu0 %v1288
        %1354 = vmatprep.subr.mxu0 %v1291
        %1355 = vmatpush1.xpose.msra.mxu0 %v1290
        %1356 = vmatprep.subr.mxu0 %v1293
        %1357 = vmatpush1.xpose.msra.mxu0 %v1292
        %1358 = vmatprep.subr.mxu0 %v1295
        %1359 = vmatpush1.xpose.msra.mxu0 %v1294
        %1360 = vmatprep.subr.mxu0 %v1297
        %1361 = vmatpush1.xpose.msra.mxu0 %v1296
        %1362 = vmatprep.subr.mxu0 %v1299
        %1363 = vmatpush1.xpose.msra.mxu0 %v1298
        %1364 = vmatprep.subr.mxu0 %v1301
        %1365 = vmatpush1.xpose.msra.mxu0 %v1300
        %1366 = vmatprep.subr.mxu0 %v1303
        %1367 = vmatpush1.xpose.msra.mxu0 %v1302
        %1368 = vmatprep.subr.mxu0 %v1305
        %1369 = vmatpush1.xpose.msra.mxu0 %v1304
        %1370 = vmatprep.subr.mxu0 %v1307
        %1371 = vmatpush1.xpose.msra.mxu0 %v1306
        %1372 = vmatprep.mubr.f32.mxu0 %v381
        %1373 = vmatmul.mubr.f32.gmra.mrb[0].mxu0 %v379
        %v1374 = vpop.f32.mrb[0].mxu0
        %v1375 = vadd.f32 0.0, %v1374
        %v1376 = vpop.f32.mrb[0].mxu0
        %v1377 = vadd.f32 0.0, %v1376
        %1378 = vmatprep.mubr.f32.mxu0 %v387
        %1379 = vmatmul.mubr.f32.gmra.mrb[0].mxu0 %v385
        %v1380 = vpop.f32.mrb[0].mxu0
        %v1381 = vadd.f32 0.0, %v1380
        %v1382 = vpop.f32.mrb[0].mxu0
        %v1383 = vadd.f32 0.0, %v1382
        %1384 = vmatprep.mubr.f32.mxu0 %v393
        %1385 = vmatmul.mubr.f32.gmra.mrb[0].mxu0 %v391
        %v1386 = vpop.f32.mrb[0].mxu0
        %v1387 = vadd.f32 0.0, %v1386
        %v1388 = vpop.f32.mrb[0].mxu0
        %v1389 = vadd.f32 0.0, %v1388
        %1390 = vmatprep.mubr.f32.mxu0 %v399
        %1391 = vmatmul.mubr.f32.gmra.mrb[0].mxu0 %v397
        %v1392 = vpop.f32.mrb[0].mxu0
        %v1393 = vadd.f32 0.0, %v1392
        %v1394 = vpop.f32.mrb[0].mxu0
        %v1395 = vadd.f32 0.0, %v1394
        %1396 = vdwg.mxu0
        %v1397 = vstv %s246
        %v1398 = vmul.f32 %v1397, %v1375
        %v1399 = vmul.f32 %v1397, %v1377
        %v1400 = vmul.f32 %v1397, %v1381
        %v1401 = vmul.f32 %v1397, %v1383
        %v1402 = vmul.f32 %v1397, %v1387
        %v1403 = vmul.f32 %v1397, %v1389
        %v1404 = vmul.f32 %v1397, %v1393
        %v1405 = vmul.f32 %v1397, %v1395
        %v1406 = vadd.f32 %v1398, %v257
        %v1407 = vadd.f32 %v1399, %v258
        %v1408 = vadd.f32 %v1400, %v259
        %v1409 = vadd.f32 %v1401, %v260
        %v1410 = vadd.f32 %v1402, %v261
        %v1411 = vadd.f32 %v1403, %v262
        %v1412 = vadd.f32 %v1404, %v263
        %v1413 = vadd.f32 %v1405, %v264
        %1414 = vst [vmem:[%s245] sm:$0xff] %v1406
        %1415 = vst [vmem:[%s245 + $0x8] sm:$0xff] %v1407
        %1416 = vst [vmem:[%s245 + $0x10] sm:$0xff] %v1408
        %1417 = vst [vmem:[%s245 + $0x18] sm:$0xff] %v1409
        %1418 = vst [vmem:[%s245 + $0x20] sm:$0xff] %v1410
        %1419 = vst [vmem:[%s245 + $0x28] sm:$0xff] %v1411
        %1420 = vst [vmem:[%s245 + $0x30] sm:$0xff] %v1412
        %1421 = vst [vmem:[%s245 + $0x38] sm:$0xff] %v1413
        %s1422 = sand.u32 %s120, 1
        %s1423 = scalar_lea.sflag [#allocation5], %s1422
        %s1424 = sand.u32 %s120, 1
        %s1425 = smul.addr %s1424, 64
        %s1426 = scalar_lea.vmem [#allocation9], %s1425
        // Predicated region
        $region49: #{tpu_custom_call.1} parent=35 // pred_check
          %p1427 = pneg %p130
        $region50: #{tpu_custom_call.1} parent=35 // pred_check_branch
          %1429 = sbr.rel (%p1427) target = $region52
        $region51: #{tpu_custom_call.1} parent=35 // pred_region
          %s1431 = ssub.s32 1024, 1024
          %1432 = vsyncadd %s1423, %s1431
          %s1433 = smul.addr %s23, 8
          %s1434 = smul.addr %s1433, 128
          %s1435 = scalar_lea.hbm %s4, %s1434
          %s1436 = sshll.u32 %s1426, 4
          %s1437 = int_to_ptr.vmem [resolvable:$true] %s1436
          %1442 = dma.vmem_to_hbm [thread:$0]  %s1437, 1024, %s1435, %s1423, 256, 256, 16
        $region52: #{tpu_custom_call.1} parent=35 // pred_fallthru
          _
      $region36: #{tpu_custom_call.1} parent=5 // pred_fallthru
        _
      %p1443 = scmp.le.s32.totalorder 2, %s18
      // Predicated region
      $region53: #{tpu_custom_call.1} parent=5 // pred_check
        %p1444 = pneg %p1443
      $region54: #{tpu_custom_call.1} parent=5 // pred_check_branch
        %1446 = sbr.rel (%p1444) target = $region56
      $region55: #{tpu_custom_call.1} parent=5 // pred_region
        %s1447 = ssub.s32 %s18, 2
        // Predicated region
        $region57: #{tpu_custom_call.1} parent=55 // pred_check
          %p1448 = pneg %p136
        $region58: #{tpu_custom_call.1} parent=55 // pred_check_branch
          %1450 = sbr.rel (%p1448) target = $region60
        $region59: #{tpu_custom_call.1} parent=55 // pred_region
          %s1451 = sand.u32 %s121, 1
          %s1452 = scalar_lea.sflag [#allocation5], %s1451
          %s1453 = sand.u32 %s121, 1
          %s1454 = smul.addr %s1453, 64
          %s1455 = scalar_lea.vmem [#allocation9], %s1454
          %1456 = dma.done %s1452, 1024
        $region60: #{tpu_custom_call.1} parent=55 // pred_fallthru
          _
      $region56: #{tpu_custom_call.1} parent=5 // pred_fallthru
        _
    $region6: #{tpu_custom_call.1} parent=1 // loop_footer
      %s22 = sadd.s32 1, %s18
    $region7: #{tpu_custom_call.1} parent=1 // loop_footer_branch
      %17 = sbr.rel target = $region3
    $region8: #{tpu_custom_call.1} parent=1 // loop_exit
      _
    %1457 = vsyncpa [#allocation4], 1
    %s1458 = scalar_lea.sflag [#allocation4], 1
    %1459 = vsyncpa %s1458, 1
    %1460 = vsyncpa [#allocation7], 1
    %1461 = vsyncpa [#allocation5], 1
    %s1462 = scalar_lea.sflag [#allocation5], 1
    %1463 = vsyncpa %s1462, 1

</llo_original>
